<compile_context>
chip_gen: v7x
topology: tpu7x:2x2x1
jax: 0.10.0
libtpu: 0.0.40
codegen_flags: <defaults>
</compile_context>

<pallas_src>
import functools

import jax
import jax.numpy as jnp
from jax.experimental import pallas as pl
from jax.experimental.pallas import tpu as pltpu


def _round_up(x, m):
    return (x + m - 1) // m * m


def _cdiv(a, b):
    return -(-a // b)


def _choose_pack(K, N):
    """Patches packed per matmul row: prefer smallest pack with (pack*N)%128==0
    (unmasked full-lane output stores), bounded by block-diag weight growth."""
    for p in range(1, 9):
        if (p * N) % 128 == 0 and p * p * K * N * 2 <= (8 << 20):
            return p
    p = max(1, min(8, _cdiv(128, N)))           # at least fill 128 lanes
    while p > 1 and p * p * K * N * 2 > (8 << 20):
        p -= 1
    return p


def _patch_embed_kernel(x_ref, w_ref, b_ref, o_ref):
    # x_ref: (tm, KPp) bf16 | w_ref: (KPp, NP) bf16 | b_ref: (1, NP) f32
    # o_ref: (tm, NP) out_dtype
    acc = jnp.dot(x_ref[...], w_ref[...], preferred_element_type=jnp.float32)
    o_ref[...] = (acc + b_ref[...]).astype(o_ref.dtype)


@functools.partial(jax.jit, static_argnames=("patch_size", "out_dtype"))
def patch_embed_forward(x, weight, bias, patch_size, out_dtype=jnp.bfloat16):
    """
    x:      (B, input_steps, num_features, Ih, Iw)  float32
    weight: (dim, C_in, ph, pw)                     float32  (PyTorch Conv2d layout)
    bias:   (dim,)                                  float32
    returns (B, L, dim) in out_dtype (bf16 by default; pass jnp.float32 for f32)
    """
    B, ins, fn, Ih, Iw = x.shape
    ph, pw = patch_size
    dim = weight.shape[0]
    c_in = ins * fn
    Hp, Wp = Ih // ph, Iw // pw                 # floor, matching Conv2d stride==kernel
    L = Hp * Wp
    M = B * L
    K = c_in * ph * pw
    N = dim
    out_bytes = jnp.dtype(out_dtype).itemsize

    # Degenerate shapes: nothing to compute.
    if M == 0 or K == 0 or N == 0:
        return jnp.zeros((B, L, N), out_dtype)

    # ---- im2col in XLA (one fused bf16 cast + relayout pass) ----
    xb = x.astype(jnp.bfloat16).reshape(B, c_in, Ih, Iw)
    xb = xb[:, :, : Hp * ph, : Wp * pw]         # drop non-divisible remainder
    xb = xb.reshape(B, c_in, Hp, ph, Wp, pw).transpose(0, 2, 4, 1, 3, 5)
    x_mat = xb.reshape(M, K)                    # rows: (b, hp, wp) ; cols: (c, kh, kw)

    # Weight as a (K, N) matrix with columns matching x_mat's (c, kh, kw) order.
    w_mat = weight.reshape(N, K).T.astype(jnp.bfloat16)

    # ---- pack patches so the output is lane-dense and the MXU is well fed ----
    pack = _choose_pack(K, N)
    KP, NP = pack * K, pack * N
    KPp = _round_up(KP, 128)
    if (KPp - KP) * 8 > KP:                     # only pad K if <=12.5% extra bytes
        KPp = KP

    # Feasibility guard: if even a 16-row tile would blow VMEM, fall back to XLA.
    if KPp * NP * 2 + 2 * 16 * (KPp * 2 + NP * out_bytes) > (44 << 20):
        # TODO(synk): add a K-split reduction grid axis instead of this fallback.
        out = jnp.dot(x_mat, w_mat, preferred_element_type=jnp.float32) + bias
        return out.astype(out_dtype).reshape(B, L, N)

    # ---- row tiling (bf16-aligned, bounded padding, >=2 steps when possible) ----
    mp = _cdiv(M, pack)                         # packed rows (pre-padding)
    mp16 = max(16, _round_up(mp, 16))           # pad rows to a multiple of 16 only
    tm_cap = min(2048,
                 (8 << 20) // (KPp * 2),        # ~8 MiB bf16 activations per buffer
                 (4 << 20) // (NP * out_bytes)) # ~4 MiB output per buffer
    tm_cap = max(16, tm_cap // 16 * 16)
    nt = _cdiv(mp16, tm_cap)
    if nt == 1 and mp16 >= 32:
        nt = 2                                  # keep both v7x TensorCores busy
    tm = _round_up(_cdiv(mp16, nt), 16)         # multiple of 16, <= mp16, <= tm_cap
    grid_steps = _cdiv(mp16, tm)                # ragged last block handled by Pallas

    pad_rows = mp16 * pack - M                  # <= 16*pack - 1 patches, negligible
    if pad_rows:
        x_mat = jnp.pad(x_mat, ((0, pad_rows), (0, 0)))
    x_pk = x_mat.reshape(mp16, KP)              # free row-major reshape
    if KPp != KP:
        x_pk = jnp.pad(x_pk, ((0, 0), (0, KPp - KP)))

    # Block-diagonal packed weight / bias (tiny; hoistable if weights are static).
    w_big = jnp.kron(jnp.eye(pack, dtype=jnp.bfloat16), w_mat)     # (KP, NP)
    if KPp != KP:
        w_big = jnp.pad(w_big, ((0, KPp - KP), (0, 0)))
    b_big = jnp.tile(bias.astype(jnp.float32), pack).reshape(1, NP)

    # ---- explicit VMEM budget + cost hint ----
    footprint = (2 * tm * KPp * 2 + 2 * tm * NP * out_bytes
                 + KPp * NP * 2 + 2 * NP * 4)
    vmem_limit = int(min(48 << 20, max(16 << 20, footprint + (footprint >> 2))))

    cost = pl.CostEstimate(
        flops=2 * mp16 * KPp * NP,
        transcendentals=0,
        bytes_accessed=(mp16 * KPp * 2 + KPp * NP * 2 + NP * 4
                        + mp16 * NP * out_bytes),
    )

    out = pl.pallas_call(
        _patch_embed_kernel,
        out_shape=jax.ShapeDtypeStruct((mp16, NP), out_dtype),
        grid=(grid_steps,),
        in_specs=[
            pl.BlockSpec((tm, KPp), lambda i: (i, 0)),   # activations: tiled rows
            pl.BlockSpec((KPp, NP), lambda i: (0, 0)),   # weight: resident
            pl.BlockSpec((1, NP), lambda i: (0, 0)),     # bias: resident
        ],
        out_specs=pl.BlockSpec((tm, NP), lambda i: (i, 0)),
        compiler_params=pltpu.CompilerParams(
            dimension_semantics=("parallel",),
            vmem_limit_bytes=vmem_limit,
        ),
        cost_estimate=cost,
    )(x_pk, w_big, b_big)

    # (mp16, pack*N) -> (mp16*pack, N) -> drop pad -> (B, L, N); reshapes are free.
    return out.reshape(mp16 * pack, N)[:M].reshape(B, L, N)


if __name__ == "__main__":
    # Small, module-consistent shapes.
    image_size = (16, 16)
    patch_size = (4, 4)
    input_steps = 2
    num_features = 2
    dim = 32
    B = 2

    key = jax.random.PRNGKey(0)
    kx, kw, kb = jax.random.split(key, 3)

    x = jax.random.normal(
        kx, (B, input_steps, num_features, *image_size), dtype=jnp.float32
    )
    c_in = input_steps * num_features
    weight = jax.random.normal(
        kw, (dim, c_in, patch_size[0], patch_size[1]), dtype=jnp.float32
    ) * 0.05
    bias = jax.random.normal(kb, (dim,), dtype=jnp.float32) * 0.05

    out = patch_embed_forward(x, weight, bias, patch_size=patch_size)
    out = jax.block_until_ready(out)

    # Reference: same conv math with the same bf16 input/weight rounding, f32 accum.
    Hp, Wp = image_size[0] // patch_size[0], image_size[1] // patch_size[1]
    xr = x.astype(jnp.bfloat16).astype(jnp.float32).reshape(B, c_in, *image_size)
    wr = weight.astype(jnp.bfloat16).astype(jnp.float32)
    xp = xr.reshape(B, c_in, Hp, patch_size[0], Wp, patch_size[1])
    ref = jnp.einsum(
        "bchpwq,dcpq->bhwd", xp, wr, preferred_element_type=jnp.float32
    ) + bias
    ref = ref.reshape(B, Hp * Wp, dim)

    assert out.shape == (B, Hp * Wp, dim)
    assert out.dtype == jnp.bfloat16
    outf = out.astype(jnp.float32)
    assert jnp.allclose(outf, ref, atol=3e-2, rtol=3e-2), float(
        jnp.max(jnp.abs(outf - ref))
    )

    print("KERNEL_OK")
</pallas_src>

<mosaic_0001>
module attributes {stable_mosaic.version = 11 : i64} {
  func.func @_patch_embed_kernel(%arg0: i32, %arg1: memref<16x256xbf16, #tpu.memory_space<vmem>>, %arg2: memref<256x128xbf16, #tpu.memory_space<vmem>>, %arg3: memref<1x128xf32, #tpu.memory_space<vmem>>, %arg4: memref<16x128xbf16, #tpu.memory_space<vmem>>) attributes {dimension_semantics = [#tpu.dimension_semantics<parallel>], iteration_bounds = array<i64: 1>, scalar_prefetch = 0 : i64, scratch_operands = 0 : i64, tpu.core_type = #tpu.core_type<tc>, window_params = [{transform_indices = @transform_0, window_bounds = array<i64: 16, 256>}, {pipeline_mode = #tpu.pipeline_mode<synchronous>, transform_indices = @transform_1, window_bounds = array<i64: 256, 128>}, {pipeline_mode = #tpu.pipeline_mode<synchronous>, transform_indices = @transform_2, window_bounds = array<i64: 1, 128>}, {transform_indices = @transform_3, window_bounds = array<i64: 16, 128>}]} {
    %c0 = arith.constant 0 : index
    %c0_0 = arith.constant 0 : index
    %0 = vector.load %arg1[%c0, %c0_0] : memref<16x256xbf16, #tpu.memory_space<vmem>>, vector<16x256xbf16>
    %c0_1 = arith.constant 0 : index
    %c0_2 = arith.constant 0 : index
    %1 = vector.load %arg2[%c0_1, %c0_2] : memref<256x128xbf16, #tpu.memory_space<vmem>>, vector<256x128xbf16>
    %cst = arith.constant dense<0.000000e+00> : vector<16x128xf32>
    %2 = tpu.matmul %0, %1, %cst {dimension_numbers = #tpu.dot_dimension_numbers<[1], [0], [0], [1], [0, 0, 1, 1], [], []>} : vector<16x256xbf16>, vector<256x128xbf16>, vector<16x128xf32> -> vector<16x128xf32>
    %c0_3 = arith.constant 0 : index
    %c0_4 = arith.constant 0 : index
    %3 = vector.load %arg3[%c0_3, %c0_4] : memref<1x128xf32, #tpu.memory_space<vmem>>, vector<1x128xf32>
    %4 = vector.broadcast %3 : vector<1x128xf32> to vector<16x128xf32>
    %5 = arith.addf %2, %4 : vector<16x128xf32>
    %6 = arith.truncf %5 : vector<16x128xf32> to vector<16x128xbf16>
    %c0_5 = arith.constant 0 : index
    %c0_6 = arith.constant 0 : index
    %7 = vector.load %arg4[%c0_5, %c0_6] : memref<16x128xbf16, #tpu.memory_space<vmem>>, vector<16x128xbf16>
    tpu.vector_store %arg4[%c0_5, %c0_6], %6 {strides = array<i32>} : memref<16x128xbf16, #tpu.memory_space<vmem>>, vector<16x128xbf16>,
    return
  }
  func.func @transform_0(%arg0: i32) -> (i32, i32) {
    %c0_i32 = arith.constant 0 : i32
    %c0_i32_0 = arith.constant 0 : i32
    return %arg0, %c0_i32 : i32, i32
  }
  func.func @transform_1(%arg0: i32) -> (i32, i32) {
    %c0_i32 = arith.constant 0 : i32
    %c0_i32_0 = arith.constant 0 : i32
    %c0_i32_1 = arith.constant 0 : i32
    return %c0_i32, %c0_i32_0 : i32, i32
  }
  func.func @transform_2(%arg0: i32) -> (i32, i32) {
    %c0_i32 = arith.constant 0 : i32
    %c0_i32_0 = arith.constant 0 : i32
    %c0_i32_1 = arith.constant 0 : i32
    return %c0_i32, %c0_i32_0 : i32, i32
  }
  func.func @transform_3(%arg0: i32) -> (i32, i32) {
    %c0_i32 = arith.constant 0 : i32
    %c0_i32_0 = arith.constant 0 : i32
    return %arg0, %c0_i32 : i32, i32
  }
}

</mosaic_0001>

<llo_original>
// kernel: tile.8
$region0: #{tile.8}
  #allocation0 [shape = 's32[1]{0}', space=sflag, size = 0x4, scoped, tag = 'scoped memory for tile.8']
  %s0 = inlined_call_operand.vmem [shape: f32[32], index: 0, kind: input, shape index: {}]
  %s1 = inlined_call_operand.vmem [shape: f32[4,32], index: 1, kind: output, shape index: {}]
  // Predicated region
  $region2: #{tile.8} parent=0 // pred_check
    _
  $region3: #{tile.8} parent=0 // pred_check_branch
    %3 = sbr.rel (0) target = $region5
  $region4: #{tile.8} parent=0 // pred_region
    _
  $region5: #{tile.8} parent=0 // pred_fallthru
    _
  %v4 = vld [vmem:[%s0] ss:$0 sm:$0xff]
  %5 = vst [vmem:[%s1] sm:$0xf] %v4

// kernel: tile.9
$region0: #{tile.9}
  %s0 = inlined_call_operand.vmem [shape: f32[4,32], index: 0, kind: input, shape index: {}]
  %s1 = inlined_call_operand.vmem [shape: f32[1,128], index: 1, kind: output, shape index: {}]
  $region1: #{tile.9} parent=0
    #allocation0 [shape = 'u8[4096]{0}', space=vmem, size = 0x1000, scoped, tag = 'scoped mem for output reshape']
    #allocation1 [shape = 'u8[4096]{0}', space=vmem, size = 0x1000, scoped, tag = 'scoped mem for input reshape']
    %s3 = sshllo.u32 0, 4
    %v4 = vld [vmem:[%s0] sm:%s3]
    %5 = vst [vmem:[#allocation1] sm:%s3] %v4
    %v6 = vld [vmem:[#allocation1] sm:$0x1]
    %vm7 = vcmask 261120
    %8 = vst.msk [vmem:[#allocation0] sm:$0x1] %vm7, %v6
    %s9 = scalar_lea.vmem [#allocation1], 3
    %v10 = vld [vmem:[%s9] sm:$0x1]
    %11 = vrot.lane.b32.xlu0 %v10, 96
    %v12 = vpop.permute.xlu0 %11
    %vm13 = vcmask 1048320
    %14 = vst.msk [vmem:[#allocation0] sm:$0x1] %vm13, %v12
    %s15 = scalar_lea.vmem [#allocation1], 2
    %v16 = vld [vmem:[%s15] sm:$0x1]
    %17 = vrot.lane.b32.xlu0 %v16, 64
    %v18 = vpop.permute.xlu0 %17
    %vm19 = vcmask 785920
    %20 = vst.msk [vmem:[#allocation0] sm:$0x1] %vm19, %v18
    %s21 = scalar_lea.vmem [#allocation1], 1
    %v22 = vld [vmem:[%s21] sm:$0x1]
    %23 = vrot.lane.b32.xlu0 %v22, 32
    %v24 = vpop.permute.xlu0 %23
    %vm25 = vcmask 523520
    %26 = vst.msk [vmem:[#allocation0] sm:$0x1] %vm25, %v24
    %s28 = sshllo.u32 0, 1
    %v30 = vld [vmem:[#allocation0] sm:%s28]
    %s31 = sshllo.u32 0, 1
    %32 = vst [vmem:[%s1] sm:%s31] %v30

// kernel: patch_embed_forward.1
$region0: #{patch_embed_forward.1}
  #allocation0 [shape = 'u32[]', space=smem, size = 0x4, offset = 0x4, fixed_abs, tag = 'smem constant byte address 0x4 - core index']
  #allocation1 [shape = 'u32[144,128]{1,0:T(1,128)}', space=vmem, size = 0x12000, scoped, tag = 'internal scratch']
  %s0 = inlined_call_operand.vmem [shape: bf16[16,256], index: 0, kind: input, shape index: {}]
  %s1 = inlined_call_operand.vmem [shape: bf16[256,128], index: 1, kind: input, shape index: {}]
  %s2 = inlined_call_operand.vmem [shape: f32[1,128], index: 2, kind: input, shape index: {}]
  %s3 = inlined_call_operand.vmem [shape: bf16[16,128], index: 3, kind: output, shape index: {}]
  %s4 = sld [smem:[#allocation0]]
  $region22: #{patch_embed_forward.1} parent=0
    _
  %s6 = ssub.s32 1, %s4
  %s7 = scalar_select 0, %s6, %s4
  // Predicated region
  $region2: #{patch_embed_forward.1} parent=0 // pred_check
    _
  $region3: #{patch_embed_forward.1} parent=0 // pred_check_branch
    %9 = sbr.rel (0) target = $region5
  $region4: #{patch_embed_forward.1} parent=0 // pred_region
    _
  $region5: #{patch_embed_forward.1} parent=0 // pred_fallthru
    _
  // Predicated region
  $region6: #{patch_embed_forward.1} parent=0 // pred_check
    _
  $region7: #{patch_embed_forward.1} parent=0 // pred_check_branch
    %11 = sbr.rel (0) target = $region9
  $region8: #{patch_embed_forward.1} parent=0 // pred_region
    _
  $region9: #{patch_embed_forward.1} parent=0 // pred_fallthru
    _
  // Predicated region
  $region10: #{patch_embed_forward.1} parent=0 // pred_check
    _
  $region11: #{patch_embed_forward.1} parent=0 // pred_check_branch
    %13 = sbr.rel (0) target = $region13
  $region12: #{patch_embed_forward.1} parent=0 // pred_region
    _
  $region13: #{patch_embed_forward.1} parent=0 // pred_fallthru
    _
  %v15 = vld [vmem:[%s0] sm:$0xff]
  %v16 = vld [vmem:[%s0 + $0x8] sm:$0xff]
  %v17 = vld [vmem:[%s1] sm:$0xf]
  %v18 = vld [vmem:[%s1 + $0x4] sm:$0xf]
  %v19 = vld [vmem:[%s1 + $0x8] sm:$0xf]
  %v20 = vld [vmem:[%s1 + $0xc] sm:$0xf]
  %v21 = vld [vmem:[%s1 + $0x10] sm:$0xf]
  %v22 = vld [vmem:[%s1 + $0x14] sm:$0xf]
  %v23 = vld [vmem:[%s1 + $0x18] sm:$0xf]
  %v24 = vld [vmem:[%s1 + $0x1c] sm:$0xf]
  %v25 = vld [vmem:[%s1 + $0x20] sm:$0xf]
  %v26 = vld [vmem:[%s1 + $0x24] sm:$0xf]
  %v27 = vld [vmem:[%s1 + $0x28] sm:$0xf]
  %v28 = vld [vmem:[%s1 + $0x2c] sm:$0xf]
  %v29 = vld [vmem:[%s1 + $0x30] sm:$0xf]
  %v30 = vld [vmem:[%s1 + $0x34] sm:$0xf]
  %v31 = vld [vmem:[%s1 + $0x38] sm:$0xf]
  %v32 = vld [vmem:[%s1 + $0x3c] sm:$0xf]
  %v33 = vld [vmem:[%s1 + $0x40] sm:$0xf]
  %v34 = vld [vmem:[%s1 + $0x44] sm:$0xf]
  %v35 = vld [vmem:[%s1 + $0x48] sm:$0xf]
  %v36 = vld [vmem:[%s1 + $0x4c] sm:$0xf]
  %v37 = vld [vmem:[%s1 + $0x50] sm:$0xf]
  %v38 = vld [vmem:[%s1 + $0x54] sm:$0xf]
  %v39 = vld [vmem:[%s1 + $0x58] sm:$0xf]
  %v40 = vld [vmem:[%s1 + $0x5c] sm:$0xf]
  %v41 = vld [vmem:[%s1 + $0x60] sm:$0xf]
  %v42 = vld [vmem:[%s1 + $0x64] sm:$0xf]
  %v43 = vld [vmem:[%s1 + $0x68] sm:$0xf]
  %v44 = vld [vmem:[%s1 + $0x6c] sm:$0xf]
  %v45 = vld [vmem:[%s1 + $0x70] sm:$0xf]
  %v46 = vld [vmem:[%s1 + $0x74] sm:$0xf]
  %v47 = vld [vmem:[%s1 + $0x78] sm:$0xf]
  %v48 = vld [vmem:[%s1 + $0x7c] sm:$0xf]
  %v49 = vld [vmem:[%s2] sm:$0x1]
  %v51 = vlaneseq
  %v52 = vshrl.u32 %v51, 7
  %v53 = vsub.s32 0, %v52
  %v54 = vrot.slane %v49, %v53
  %v58 = vunpack.c.l.b16 %v15
  %v59 = vunpack.c.h.b16 %v15
  %v60 = vunpack.c.l.b16 %v16
  %v61 = vunpack.c.h.b16 %v16
  %v62 = vpack.c.b16 %v60, %v58
  %v63 = vpack.c.b16 %v61, %v59
  %v98 = vunpack.c.l.b16 %v17
  %v99 = vunpack.c.l.b16 %v18
  %v100 = vunpack.c.l.b16 %v19
  %v101 = vunpack.c.l.b16 %v20
  %v102 = vunpack.c.l.b16 %v21
  %v103 = vunpack.c.l.b16 %v22
  %v104 = vunpack.c.l.b16 %v23
  %v105 = vunpack.c.l.b16 %v24
  %v106 = vunpack.c.l.b16 %v25
  %v107 = vunpack.c.l.b16 %v26
  %v108 = vunpack.c.l.b16 %v27
  %v109 = vunpack.c.l.b16 %v28
  %v110 = vunpack.c.l.b16 %v29
  %v111 = vunpack.c.l.b16 %v30
  %v112 = vunpack.c.l.b16 %v31
  %v113 = vunpack.c.l.b16 %v32
  %v114 = vunpack.c.l.b16 %v33
  %v115 = vunpack.c.l.b16 %v34
  %v116 = vunpack.c.l.b16 %v35
  %v117 = vunpack.c.l.b16 %v36
  %v118 = vunpack.c.l.b16 %v37
  %v119 = vunpack.c.l.b16 %v38
  %v120 = vunpack.c.l.b16 %v39
  %v121 = vunpack.c.l.b16 %v40
  %v122 = vunpack.c.l.b16 %v41
  %v123 = vunpack.c.l.b16 %v42
  %v124 = vunpack.c.l.b16 %v43
  %v125 = vunpack.c.l.b16 %v44
  %v126 = vunpack.c.l.b16 %v45
  %v127 = vunpack.c.l.b16 %v46
  %v128 = vunpack.c.l.b16 %v47
  %v129 = vunpack.c.l.b16 %v48
  %v130 = vpack.c.b16 %v99, %v98
  %v131 = vpack.c.b16 %v101, %v100
  %v132 = vpack.c.b16 %v103, %v102
  %v133 = vpack.c.b16 %v105, %v104
  %v134 = vpack.c.b16 %v107, %v106
  %v135 = vpack.c.b16 %v109, %v108
  %v136 = vpack.c.b16 %v111, %v110
  %v137 = vpack.c.b16 %v113, %v112
  %v138 = vpack.c.b16 %v115, %v114
  %v139 = vpack.c.b16 %v117, %v116
  %v140 = vpack.c.b16 %v119, %v118
  %v141 = vpack.c.b16 %v121, %v120
  %v142 = vpack.c.b16 %v123, %v122
  %v143 = vpack.c.b16 %v125, %v124
  %v144 = vpack.c.b16 %v127, %v126
  %v145 = vpack.c.b16 %v129, %v128
  %162 = vmatprep.subr.bf16.mxu0 0
  %163 = vmatpush1.bf16.msra.mxu0 %v130
  %164 = vmatprep.subr.bf16.mxu0 0
  %165 = vmatpush1.bf16.msra.mxu0 %v131
  %166 = vmatprep.subr.bf16.mxu0 0
  %167 = vmatpush1.bf16.msra.mxu0 %v132
  %168 = vmatprep.subr.bf16.mxu0 0
  %169 = vmatpush1.bf16.msra.mxu0 %v133
  %170 = vmatprep.subr.bf16.mxu0 0
  %171 = vmatpush1.bf16.msra.mxu0 %v134
  %172 = vmatprep.subr.bf16.mxu0 0
  %173 = vmatpush1.bf16.msra.mxu0 %v135
  %174 = vmatprep.subr.bf16.mxu0 0
  %175 = vmatpush1.bf16.msra.mxu0 %v136
  %176 = vmatprep.subr.bf16.mxu0 0
  %177 = vmatpush1.bf16.msra.mxu0 %v137
  %178 = vmatprep.subr.bf16.mxu0 0
  %179 = vmatpush1.bf16.msra.mxu0 %v138
  %180 = vmatprep.subr.bf16.mxu0 0
  %181 = vmatpush1.bf16.msra.mxu0 %v139
  %182 = vmatprep.subr.bf16.mxu0 0
  %183 = vmatpush1.bf16.msra.mxu0 %v140
  %184 = vmatprep.subr.bf16.mxu0 0
  %185 = vmatpush1.bf16.msra.mxu0 %v141
  %186 = vmatprep.subr.bf16.mxu0 0
  %187 = vmatpush1.bf16.msra.mxu0 %v142
  %188 = vmatprep.subr.bf16.mxu0 0
  %189 = vmatpush1.bf16.msra.mxu0 %v143
  %190 = vmatprep.subr.bf16.mxu0 0
  %191 = vmatpush1.bf16.msra.mxu0 %v144
  %192 = vmatprep.subr.bf16.mxu0 0
  %193 = vmatpush1.bf16.msra.mxu0 %v145
  %194 = vmatprep.mubr.bf16.mxu0 %v63
  %195 = vmatmul.mubr.bf16.gmra.mrb[0].mxu0 %v62
  %v196 = vpop.f32.mrb[0].mxu0
  %v197 = vadd.f32 %v54, %v196
  %v198 = vpop.f32.mrb[0].mxu0
  %v199 = vpop.f32.mrb[0].mxu0
  %v200 = vadd.f32 %v54, %v199
  %v201 = vpop.f32.mrb[0].mxu0
  %202 = vdwg.mxu0
  %v203 = vpack.c.bf16 %v200, %v197
  %v205 = vunpack.c.l.b16 %v203
  %v206 = vunpack.c.h.b16 %v203
  %v207 = vpack.c.b16 %v205, %v205
  %v208 = vpack.c.b16 %v206, %v206
  %211 = vst [vmem:[%s3] sm:$0xf] %v207
  %212 = vst [vmem:[%s3 + $0x4] sm:$0xf] %v208
  // Predicated region
  $region14: #{patch_embed_forward.1} parent=0 // pred_check
    _
  $region15: #{patch_embed_forward.1} parent=0 // pred_check_branch
    %214 = sbr.rel (0) target = $region17
  $region16: #{patch_embed_forward.1} parent=0 // pred_region
    _
  $region17: #{patch_embed_forward.1} parent=0 // pred_fallthru
    _
  // Predicated region
  $region18: #{patch_embed_forward.1} parent=0 // pred_check
    _
  $region19: #{patch_embed_forward.1} parent=0 // pred_check_branch
    %216 = sbr.rel (0) target = $region21
  $region20: #{patch_embed_forward.1} parent=0 // pred_region
    _
  $region21: #{patch_embed_forward.1} parent=0 // pred_fallthru
    _

</llo_original>
